<compile_context>
chip_gen: v7x
topology: tpu7x:2x2x1
jax: 0.10.0
libtpu: 0.0.40
codegen_flags: <defaults>
</compile_context>

<pallas_src>
import functools

import jax
import jax.numpy as jnp
from jax import lax
from jax.experimental import pallas as pl
from jax.experimental.pallas import tpu as pltpu


def _round_up(v, m):
    return ((v + m - 1) // m) * m


def _fused_conv_concat_kernel(p_ref, x_ref, w_ref, o_ref, *, cout, cin):
    # p_ref: (TM, K)   im2col rows of relu(bn(x))          (compute dtype)
    # x_ref: (TM, cin) matching raw-x rows                 (f32, exact passthrough)
    # w_ref: (K, Cp)   conv weight, channels zero-padded   (compute dtype)
    # o_ref: (TM, Cp)  cols [0,cout)=conv, [cout,cout+cin)=x, rest 0
    acc = jnp.dot(p_ref[...], w_ref[...], preferred_element_type=jnp.float32)
    o_ref[...] = acc.astype(o_ref.dtype)
    o_ref[:, cout:cout + cin] = x_ref[...].astype(o_ref.dtype)   # fused concat


def normal_bottle(x_nchw, gamma, beta, run_mean, run_var, w_oihw,
                  eps=1e-5, compute_dtype=jnp.float32, tile_rows_target=256):
    """x_nchw: (N, Cin, H, W) float32.  Returns (N, Cout+Cin, H, W) float32."""
    N, Cin, H, W = x_nchw.shape
    Cout = w_oihw.shape[0]
    K = 9 * Cin
    Cp = _round_up(Cout + Cin, 128)          # lane-dense out: conv + concat'd x
    R = N * H * W

    # ---- BN fold + ReLU (one fused XLA elementwise pass, NHWC) -----------
    scale = (gamma / jnp.sqrt(run_var + eps)).astype(jnp.float32)        # (Cin,)
    shift = (beta - run_mean * scale).astype(jnp.float32)                # (Cin,)
    x_nhwc = jnp.transpose(x_nchw, (0, 2, 3, 1)).astype(jnp.float32)     # (N,H,W,Cin)
    y = jnp.maximum(x_nhwc * scale + shift, 0.0)

    # ---- spatial zero-pad (AFTER the activation) + im2col rows -----------
    # K stays 9*Cin — no 128-padding of the dominant HBM stream.
    y_pad = jnp.pad(y, ((0, 0), (1, 1), (1, 1), (0, 0)))
    taps = [y_pad[:, dh:dh + H, dw:dw + W, :]
            for dh in range(3) for dw in range(3)]                       # (dh,dw) order
    patches = jnp.concatenate(taps, axis=-1).reshape(R, K).astype(compute_dtype)
    x_rows = x_nhwc.reshape(R, Cin)                                      # f32 exact

    # ---- weight OIHW -> (kh,kw,cin,cout) -> (K, Cp), lane-padded Cout ----
    w_mat = jnp.transpose(w_oihw, (2, 3, 1, 0)).reshape(K, Cout).astype(jnp.float32)
    w_mat = jnp.pad(w_mat, ((0, 0), (0, Cp - Cout))).astype(compute_dtype)

    # ---- row tiling: deep grid even for small N ---------------------------
    tm = min(tile_rows_target, max(32, (R // 4) // 32 * 32))   # multiple of 32
    Rp = _round_up(R, tm)
    if Rp != R:
        patches = jnp.pad(patches, ((0, Rp - R), (0, 0)))
        x_rows = jnp.pad(x_rows, ((0, Rp - R), (0, 0)))
    grid = (Rp // tm,)

    dsize = jnp.dtype(compute_dtype).itemsize
    work_bytes = (2 * (tm * K * dsize + tm * Cin * 4 + tm * Cp * 4)
                  + 2 * K * Cp * dsize)
    vmem_limit = int(min(64 * 1024 * 1024, max(4 * work_bytes, 16 * 1024 * 1024)))

    cost = pl.CostEstimate(
        flops=2 * R * K * Cout,
        transcendentals=0,
        bytes_accessed=int(Rp * K * dsize + K * Cp * dsize
                           + Rp * Cin * 4 + Rp * Cp * 4))

    kernel = functools.partial(_fused_conv_concat_kernel, cout=Cout, cin=Cin)
    out_flat = pl.pallas_call(
        kernel,
        out_shape=jax.ShapeDtypeStruct((Rp, Cp), jnp.float32),
        grid_spec=pltpu.PrefetchScalarGridSpec(
            num_scalar_prefetch=0,
            grid=grid,
            in_specs=[
                pl.BlockSpec((tm, K), lambda i: (i, 0)),       # im2col row tile
                pl.BlockSpec((tm, Cin), lambda i: (i, 0)),     # raw-x row tile
                pl.BlockSpec((K, Cp), lambda i: (0, 0)),       # grid-invariant weight
            ],
            out_specs=pl.BlockSpec((tm, Cp), lambda i: (i, 0)),
        ),
        compiler_params=pltpu.CompilerParams(
            dimension_semantics=("parallel",),
            vmem_limit_bytes=vmem_limit),
        cost_estimate=cost,
    )(patches, x_rows, w_mat)

    # ---- epilogue: drop lane padding / padded rows, back to NCHW ---------
    out_nhwc = out_flat[:R, :Cout + Cin].reshape(N, H, W, Cout + Cin)
    return jnp.transpose(out_nhwc, (0, 3, 1, 2))


def _reference(x_nchw, gamma, beta, run_mean, run_var, w_oihw, eps=1e-5):
    # pure-JAX reference (inference-mode BN), NCHW throughout
    inv = 1.0 / jnp.sqrt(run_var + eps)
    y = (x_nchw - run_mean[None, :, None, None]) * inv[None, :, None, None]
    y = y * gamma[None, :, None, None] + beta[None, :, None, None]
    y = jnp.maximum(y, 0.0)
    conv = lax.conv_general_dilated(
        y, w_oihw, window_strides=(1, 1), padding=((1, 1), (1, 1)),
        dimension_numbers=("NCHW", "OIHW", "NCHW"))
    return jnp.concatenate([conv, x_nchw], axis=1)


if __name__ == "__main__":
    # small shapes consistent with the module: in_planes=4, growth_rate=12
    N, Cin, H, W = 2, 4, 16, 16
    growth_rate = 12

    key = jax.random.PRNGKey(0)
    k_x, k_w, k_g, k_b, k_m, k_v = jax.random.split(key, 6)

    x = jax.random.normal(k_x, (N, Cin, H, W), dtype=jnp.float32)
    w = jax.random.normal(k_w, (growth_rate, Cin, 3, 3), dtype=jnp.float32) * 0.1
    gamma = 1.0 + 0.1 * jax.random.normal(k_g, (Cin,), dtype=jnp.float32)
    beta = 0.1 * jax.random.normal(k_b, (Cin,), dtype=jnp.float32)
    run_mean = 0.1 * jax.random.normal(k_m, (Cin,), dtype=jnp.float32)
    run_var = jnp.abs(1.0 + 0.1 * jax.random.normal(k_v, (Cin,), dtype=jnp.float32))

    ref = _reference(x, gamma, beta, run_mean, run_var, w)

    # strict f32 path (holds 1e-4 vs the reference)
    fn_f32 = jax.jit(functools.partial(normal_bottle, compute_dtype=jnp.float32))
    out_f32 = jax.block_until_ready(fn_f32(x, gamma, beta, run_mean, run_var, w))
    assert out_f32.shape == (N, growth_rate + Cin, H, W), out_f32.shape
    assert jnp.allclose(out_f32, ref, atol=1e-4, rtol=1e-4), float(
        jnp.max(jnp.abs(out_f32 - ref)))

    # bf16 streaming path (v6e/v7x recommendation): halves DMA bytes, f32 accum
    fn_bf16 = jax.jit(functools.partial(normal_bottle, compute_dtype=jnp.bfloat16))
    out_bf16 = jax.block_until_ready(fn_bf16(x, gamma, beta, run_mean, run_var, w))
    assert out_bf16.shape == (N, growth_rate + Cin, H, W), out_bf16.shape
    assert jnp.allclose(out_bf16, ref, atol=3e-2, rtol=3e-2), float(
        jnp.max(jnp.abs(out_bf16 - ref)))

    print("KERNEL_OK")
</pallas_src>

<mosaic_0001>
module attributes {stable_mosaic.version = 11 : i64} {
  func.func @_fused_conv_concat_kernel(%arg0: i32, %arg1: memref<128x36xf32, #tpu.memory_space<vmem>>, %arg2: memref<128x4xf32, #tpu.memory_space<vmem>>, %arg3: memref<36x128xf32, #tpu.memory_space<vmem>>, %arg4: memref<128x128xf32, #tpu.memory_space<vmem>>) attributes {dimension_semantics = [#tpu.dimension_semantics<parallel>], iteration_bounds = array<i64: 4>, scalar_prefetch = 0 : i64, scratch_operands = 0 : i64, tpu.core_type = #tpu.core_type<tc>, window_params = [{transform_indices = @transform_0, window_bounds = array<i64: 128, 36>}, {transform_indices = @transform_1, window_bounds = array<i64: 128, 4>}, {pipeline_mode = #tpu.pipeline_mode<synchronous>, transform_indices = @transform_2, window_bounds = array<i64: 36, 128>}, {transform_indices = @transform_3, window_bounds = array<i64: 128, 128>}]} {
    %c0 = arith.constant 0 : index
    %c0_0 = arith.constant 0 : index
    %0 = vector.load %arg1[%c0, %c0_0] : memref<128x36xf32, #tpu.memory_space<vmem>>, vector<128x36xf32>
    %c0_1 = arith.constant 0 : index
    %c0_2 = arith.constant 0 : index
    %1 = vector.load %arg3[%c0_1, %c0_2] : memref<36x128xf32, #tpu.memory_space<vmem>>, vector<36x128xf32>
    %cst = arith.constant dense<0.000000e+00> : vector<128x128xf32>
    %2 = tpu.matmul %0, %1, %cst {dimension_numbers = #tpu.dot_dimension_numbers<[1], [0], [0], [1], [0, 0, 1, 1], [], []>} : vector<128x36xf32>, vector<36x128xf32>, vector<128x128xf32> -> vector<128x128xf32>
    %c0_3 = arith.constant 0 : index
    %c0_4 = arith.constant 0 : index
    %3 = vector.load %arg4[%c0_3, %c0_4] : memref<128x128xf32, #tpu.memory_space<vmem>>, vector<128x128xf32>
    tpu.vector_store %arg4[%c0_3, %c0_4], %2 {strides = array<i32>} : memref<128x128xf32, #tpu.memory_space<vmem>>, vector<128x128xf32>,
    %c0_5 = arith.constant 0 : index
    %c0_6 = arith.constant 0 : index
    %4 = vector.load %arg2[%c0_5, %c0_6] : memref<128x4xf32, #tpu.memory_space<vmem>>, vector<128x4xf32>
    %c0_7 = arith.constant 0 : index
    %c12 = arith.constant 12 : index
    %5 = vector.load %arg4[%c0_7, %c12] : memref<128x128xf32, #tpu.memory_space<vmem>>, vector<128x4xf32>
    tpu.vector_store %arg4[%c0_7, %c12], %4 {strides = array<i32>} : memref<128x128xf32, #tpu.memory_space<vmem>>, vector<128x4xf32>,
    return
  }
  func.func @transform_0(%arg0: i32) -> (i32, i32) {
    %c0_i32 = arith.constant 0 : i32
    %c0_i32_0 = arith.constant 0 : i32
    return %arg0, %c0_i32 : i32, i32
  }
  func.func @transform_1(%arg0: i32) -> (i32, i32) {
    %c0_i32 = arith.constant 0 : i32
    %c0_i32_0 = arith.constant 0 : i32
    return %arg0, %c0_i32 : i32, i32
  }
  func.func @transform_2(%arg0: i32) -> (i32, i32) {
    %c0_i32 = arith.constant 0 : i32
    %c0_i32_0 = arith.constant 0 : i32
    %c0_i32_1 = arith.constant 0 : i32
    return %c0_i32, %c0_i32_0 : i32, i32
  }
  func.func @transform_3(%arg0: i32) -> (i32, i32) {
    %c0_i32 = arith.constant 0 : i32
    %c0_i32_0 = arith.constant 0 : i32
    return %arg0, %c0_i32 : i32, i32
  }
}

</mosaic_0001>

<llo_original>
// kernel: normal_bottle.1
$region0: #{normal_bottle.1}
  #allocation0 [shape = 'u32[]', space=smem, size = 0x4, offset = 0x4, fixed_abs, tag = 'smem constant byte address 0x4 - core index']
  #allocation1 [shape = 'u32[144,128]{1,0:T(1,128)}', space=vmem, size = 0x12000, scoped, tag = 'internal scratch']
  %s0 = inlined_call_operand.vmem [shape: f32[512,36], index: 0, kind: input, shape index: {}]
  %s1 = inlined_call_operand.vmem [shape: f32[512,4], index: 1, kind: input, shape index: {}]
  %s2 = inlined_call_operand.vmem [shape: f32[36,128], index: 2, kind: input, shape index: {}]
  %s3 = inlined_call_operand.vmem [shape: f32[512,128], index: 3, kind: output, shape index: {}]
  %s4 = sld [smem:[#allocation0]]
  $region45: #{normal_bottle.1} parent=0
    _
  %s6 = ssub.s32 1, %s4
  %s7 = scalar_select 0, %s6, %s4
  loop: start=0, step=1, limit=6
  $region2: #{normal_bottle.1} parent=0 // loop_pre_header
    _
  $region3: #{normal_bottle.1} parent=0 // loop_header
    %s9 = sphi 0, %s13
    %p10 = scmp.ge.s32.totalorder %s9, 6
    %s19 = sphi 0, %s21
    %s22 = sphi 0, %s19
    %s23 = sphi 0, %s22
    %s39 = sphi 0, %s23
    %s45 = sphi 0, %s47
    %s48 = sphi 0, %s45
    %s49 = sphi 0, %s48
    %s65 = sphi 0, %s49
    %s69 = sphi 0, %s69
    %s71 = sphi 0, %s69
    %s72 = sphi 0, %s71
    %s86 = sphi 0, %s72
    %s92 = sphi 0, %s94
    %s95 = sphi 0, %s92
    %s96 = sphi 0, %s95
    %s112 = sphi 0, %s96
  $region4: #{normal_bottle.1} parent=0 // loop_header_branch
    %12 = sbr.rel (%p10) target = $region8
  $region5: #{normal_bottle.1} parent=0 // loop_body
    %s14 = ssub.s32 %s9, 1
    %s15 = ssub.s32 %s9, 2
    %s16 = sadd.s32 %s9, 1
    %s17 = ssub.s32 %s9, %s16
    %p18 = scmp.eq.s32.totalorder %s17, 0
    %s20 = sadd.s32 %s19, 1
    %s21 = scalar_select %p18, %s19, %s20
    %p24 = pneg %p18
    %p25 = scmp.eq.s32.totalorder %s9, 3
    %p26 = por %p24, %p25
    %p27 = scmp.ne.s32.totalorder %s19, %s22
    %p28 = scmp.eq.s32.totalorder %s9, 0
    %p29 = por %p27, %p28
    %p30 = scmp.ne.s32.totalorder %s19, %s22
    %p31 = scmp.eq.s32.totalorder %s14, 3
    %p32 = por %p30, %p31
    %p33 = scmp.ne.s32.totalorder %s22, %s23
    %p34 = scmp.eq.s32.totalorder %s14, 0
    %p35 = por %p33, %p34
    %p36 = scmp.ne.s32.totalorder %s22, %s23
    %p37 = scmp.eq.s32.totalorder %s15, 3
    %p38 = por %p36, %p37
    %p40 = scmp.ne.s32.totalorder %s23, %s39
    %p41 = scmp.eq.s32.totalorder %s15, 0
    %p42 = por %p40, %p41
    %s43 = ssub.s32 %s9, %s16
    %p44 = scmp.eq.s32.totalorder %s43, 0
    %s46 = sadd.s32 %s45, 1
    %s47 = scalar_select %p44, %s45, %s46
    %p50 = pneg %p44
    %p51 = scmp.eq.s32.totalorder %s9, 3
    %p52 = por %p50, %p51
    %p53 = scmp.ne.s32.totalorder %s45, %s48
    %p54 = scmp.eq.s32.totalorder %s9, 0
    %p55 = por %p53, %p54
    %p56 = scmp.ne.s32.totalorder %s45, %s48
    %p57 = scmp.eq.s32.totalorder %s14, 3
    %p58 = por %p56, %p57
    %p59 = scmp.ne.s32.totalorder %s48, %s49
    %p60 = scmp.eq.s32.totalorder %s14, 0
    %p61 = por %p59, %p60
    %p62 = scmp.ne.s32.totalorder %s48, %s49
    %p63 = scmp.eq.s32.totalorder %s15, 3
    %p64 = por %p62, %p63
    %p66 = scmp.ne.s32.totalorder %s49, %s65
    %p67 = scmp.eq.s32.totalorder %s15, 0
    %p68 = por %p66, %p67
    %s70 = sadd.s32 %s69, 1
    %p73 = scmp.eq.s32.totalorder %s9, 3
    %p74 = scmp.ne.s32.totalorder %s69, %s71
    %p75 = scmp.eq.s32.totalorder %s9, 0
    %p76 = por %p74, %p75
    %p77 = scmp.ne.s32.totalorder %s69, %s71
    %p78 = scmp.eq.s32.totalorder %s14, 3
    %p79 = por %p77, %p78
    %p80 = scmp.ne.s32.totalorder %s71, %s72
    %p81 = scmp.eq.s32.totalorder %s14, 0
    %p82 = por %p80, %p81
    %p83 = scmp.ne.s32.totalorder %s71, %s72
    %p84 = scmp.eq.s32.totalorder %s15, 3
    %p85 = por %p83, %p84
    %p87 = scmp.ne.s32.totalorder %s72, %s86
    %p88 = scmp.eq.s32.totalorder %s15, 0
    %p89 = por %p87, %p88
    %s90 = ssub.s32 %s9, %s16
    %p91 = scmp.eq.s32.totalorder %s90, 0
    %s93 = sadd.s32 %s92, 1
    %s94 = scalar_select %p91, %s92, %s93
    %p97 = pneg %p91
    %p98 = scmp.eq.s32.totalorder %s9, 3
    %p99 = por %p97, %p98
    %p100 = scmp.ne.s32.totalorder %s92, %s95
    %p101 = scmp.eq.s32.totalorder %s9, 0
    %p102 = por %p100, %p101
    %p103 = scmp.ne.s32.totalorder %s92, %s95
    %p104 = scmp.eq.s32.totalorder %s14, 3
    %p105 = por %p103, %p104
    %p106 = scmp.ne.s32.totalorder %s95, %s96
    %p107 = scmp.eq.s32.totalorder %s14, 0
    %p108 = por %p106, %p107
    %p109 = scmp.ne.s32.totalorder %s95, %s96
    %p110 = scmp.eq.s32.totalorder %s15, 3
    %p111 = por %p109, %p110
    %p113 = scmp.ne.s32.totalorder %s96, %s112
    %p114 = scmp.eq.s32.totalorder %s15, 0
    %p115 = por %p113, %p114
    %p116 = scmp.le.s32.totalorder 1, %s9
    %p117 = scmp.lt.s32.totalorder %s9, 5
    %p118 = pnand %p116, %p117
    %p119 = pneg %p118
    // Predicated region
    $region9: #{normal_bottle.1} parent=5 // pred_check
      _
    $region10: #{normal_bottle.1} parent=5 // pred_check_branch
      %121 = sbr.rel (%p118) target = $region12
    $region11: #{normal_bottle.1} parent=5 // pred_region
      %s122 = ssub.s32 %s9, 1
      // Predicated region
      $region13: #{normal_bottle.1} parent=11 // pred_check
        %p123 = pneg %p82
      $region14: #{normal_bottle.1} parent=11 // pred_check_branch
        %125 = sbr.rel (%p123) target = $region16
      $region15: #{normal_bottle.1} parent=11 // pred_region
        _
      $region16: #{normal_bottle.1} parent=11 // pred_fallthru
        _
    $region12: #{normal_bottle.1} parent=5 // pred_fallthru
      _
    %p126 = scmp.lt.s32.totalorder %s9, 4
    // Predicated region
    $region17: #{normal_bottle.1} parent=5 // pred_check
      %p127 = pneg %p126
    $region18: #{normal_bottle.1} parent=5 // pred_check_branch
      %129 = sbr.rel (%p127) target = $region20
    $region19: #{normal_bottle.1} parent=5 // pred_region
      // Predicated region
      $region21: #{normal_bottle.1} parent=19 // pred_check
        %p130 = pneg %p29
      $region22: #{normal_bottle.1} parent=19 // pred_check_branch
        %132 = sbr.rel (%p130) target = $region24
      $region23: #{normal_bottle.1} parent=19 // pred_region
        %s133 = smul.u32 16, %s9
        %p134 = scmp.lt.s32.totalorder %s133, 63
        %s135 = scalar_select %p134, %s133, 63
        %s136 = smul.addr %s135, 8
        %s137 = scalar_lea.vmem %s0, %s136
        %s138 = smul.u32 16, %s9
      $region24: #{normal_bottle.1} parent=19 // pred_fallthru
        _
      // Predicated region
      $region25: #{normal_bottle.1} parent=19 // pred_check
        %p139 = pneg %p55
      $region26: #{normal_bottle.1} parent=19 // pred_check_branch
        %141 = sbr.rel (%p139) target = $region28
      $region27: #{normal_bottle.1} parent=19 // pred_region
        %s142 = smul.u32 16, %s9
        %p143 = scmp.lt.s32.totalorder %s142, 63
        %s144 = scalar_select %p143, %s142, 63
        %s145 = smul.addr %s144, 8
        %s146 = scalar_lea.vmem %s1, %s145
        %s147 = smul.u32 16, %s9
      $region28: #{normal_bottle.1} parent=19 // pred_fallthru
        _
    $region20: #{normal_bottle.1} parent=5 // pred_fallthru
      _
    %p148 = scmp.le.s32.totalorder 1, %s9
    %p149 = scmp.lt.s32.totalorder %s9, 5
    %p150 = pnand %p148, %p149
    %p151 = pneg %p150
    // Predicated region
    $region29: #{normal_bottle.1} parent=5 // pred_check
      _
    $region30: #{normal_bottle.1} parent=5 // pred_check_branch
      %153 = sbr.rel (%p150) target = $region32
    $region31: #{normal_bottle.1} parent=5 // pred_region
      %s154 = ssub.s32 %s9, 1
      %s155 = smul.u32 16, %s14
      %p156 = scmp.lt.s32.totalorder %s155, 63
      %s157 = scalar_select %p156, %s155, 63
      %s158 = smul.addr %s157, 8
      %s159 = scalar_lea.vmem %s0, %s158
      %p160 = pneg %p35
      %p161 = pneg %p32
      %s162 = smul.u32 16, %s14
      %p163 = scmp.lt.s32.totalorder %s162, 63
      %s164 = scalar_select %p163, %s162, 63
      %s165 = smul.addr %s164, 8
      %s166 = scalar_lea.vmem %s1, %s165
      %p167 = pneg %p61
      %p168 = pneg %p58
      %p169 = pneg %p82
      %p170 = pneg %p79
      %p171 = pneg %p108
      %p172 = pneg %p105
      %s173 = smul.u32 16, %s14
      %p174 = scmp.lt.s32.totalorder %s173, 63
      %s175 = scalar_select %p174, %s173, 63
      %s176 = smul.addr %s175, 8
      %s177 = scalar_lea.vmem %s3, %s176
      %s178 = smul.u32 16, %s14
      %p179 = scmp.lt.s32.totalorder %s178, 63
      %s180 = scalar_select %p179, %s178, 63
      %s181 = smul.addr %s180, 8
      %s182 = scalar_lea.vmem %s0, %s181
      %s183 = smul.u32 16, %s14
      %s184 = smul.u32 16, %s14
      %p185 = scmp.lt.s32.totalorder %s184, 63
      %s186 = scalar_select %p185, %s184, 63
      %s187 = smul.addr %s186, 8
      %s188 = scalar_lea.vmem %s1, %s187
      %s189 = smul.u32 16, %s14
      %s190 = smul.u32 16, %s14
      %p191 = scmp.lt.s32.totalorder %s190, 63
      %s192 = scalar_select %p191, %s190, 63
      %s193 = smul.addr %s192, 8
      %s194 = scalar_lea.vmem %s3, %s193
      %s195 = smul.u32 16, %s14
      %v196 = vld [vmem:[%s182] sm:$0xff]
      %v197 = vld [vmem:[%s182 + $0x8] sm:$0xff]
      %v198 = vld [vmem:[%s182 + $0x10] sm:$0xff]
      %v199 = vld [vmem:[%s182 + $0x18] sm:$0xff]
      %v200 = vld [vmem:[%s182 + $0x20] sm:$0xff]
      %v201 = vld [vmem:[%s182 + $0x28] sm:$0xff]
      %v202 = vld [vmem:[%s182 + $0x30] sm:$0xff]
      %v203 = vld [vmem:[%s182 + $0x38] sm:$0xff]
      %v204 = vld [vmem:[%s182 + $0x40] sm:$0xff]
      %v205 = vld [vmem:[%s182 + $0x48] sm:$0xff]
      %v206 = vld [vmem:[%s182 + $0x50] sm:$0xff]
      %v207 = vld [vmem:[%s182 + $0x58] sm:$0xff]
      %v208 = vld [vmem:[%s182 + $0x60] sm:$0xff]
      %v209 = vld [vmem:[%s182 + $0x68] sm:$0xff]
      %v210 = vld [vmem:[%s182 + $0x70] sm:$0xff]
      %v211 = vld [vmem:[%s182 + $0x78] sm:$0xff]
      %v212 = vld [vmem:[%s2] sm:$0xff]
      %v213 = vld [vmem:[%s2 + $0x8] sm:$0xff]
      %v214 = vld [vmem:[%s2 + $0x10] sm:$0xff]
      %v215 = vld [vmem:[%s2 + $0x18] sm:$0xff]
      %v216 = vld [vmem:[%s2 + $0x20] sm:$0xf]
      %vm217 = vcmask 293888
      %v219 = vsel %vm217, %v196, 0
      %v222 = vsel %vm217, %v197, 0
      %v225 = vsel %vm217, %v198, 0
      %v228 = vsel %vm217, %v199, 0
      %v231 = vsel %vm217, %v200, 0
      %v234 = vsel %vm217, %v201, 0
      %v237 = vsel %vm217, %v202, 0
      %v240 = vsel %vm217, %v203, 0
      %v243 = vsel %vm217, %v204, 0
      %v246 = vsel %vm217, %v205, 0
      %v249 = vsel %vm217, %v206, 0
      %v252 = vsel %vm217, %v207, 0
      %v255 = vsel %vm217, %v208, 0
      %v258 = vsel %vm217, %v209, 0
      %v261 = vsel %vm217, %v210, 0
      %v264 = vsel %vm217, %v211, 0
      %vm266 = vcmask 1043456
      %v268 = vsel %vm266, %v216, 0
      %270 = vmatprep.subr.mxu0 0.0
      %271 = vmatpush1.msra.mxu0 %v212
      %272 = vmatprep.subr.mxu0 0.0
      %273 = vmatpush1.msra.mxu0 %v213
      %274 = vmatprep.subr.mxu0 0.0
      %275 = vmatpush1.msra.mxu0 %v214
      %276 = vmatprep.subr.mxu0 0.0
      %277 = vmatpush1.msra.mxu0 %v215
      %278 = vmatprep.subr.mxu0 0.0
      %279 = vmatpush1.msra.mxu0 %v268
      %280 = vmatprep.subr.mxu0 0.0
      %281 = vmatpush1.msra.mxu0 0.0
      %282 = vmatprep.subr.mxu0 0.0
      %283 = vmatpush1.msra.mxu0 0.0
      %284 = vmatprep.subr.mxu0 0.0
      %285 = vmatpush1.msra.mxu0 0.0
      %286 = vmatprep.subr.mxu0 0.0
      %287 = vmatpush1.msra.mxu0 0.0
      %288 = vmatprep.subr.mxu0 0.0
      %289 = vmatpush1.msra.mxu0 0.0
      %290 = vmatprep.subr.mxu0 0.0
      %291 = vmatpush1.msra.mxu0 0.0
      %292 = vmatprep.subr.mxu0 0.0
      %293 = vmatpush1.msra.mxu0 0.0
      %294 = vmatprep.subr.mxu0 0.0
      %295 = vmatpush1.msra.mxu0 0.0
      %296 = vmatprep.subr.mxu0 0.0
      %297 = vmatpush1.msra.mxu0 0.0
      %298 = vmatprep.subr.mxu0 0.0
      %299 = vmatpush1.msra.mxu0 0.0
      %300 = vmatprep.subr.mxu0 0.0
      %301 = vmatpush1.msra.mxu0 0.0
      %302 = vmatprep.subr.mxu0 0.0
      %303 = vmatpush1.msra.mxu0 0.0
      %304 = vmatprep.subr.mxu0 0.0
      %305 = vmatpush1.msra.mxu0 0.0
      %306 = vmatprep.subr.mxu0 0.0
      %307 = vmatpush1.msra.mxu0 0.0
      %308 = vmatprep.subr.mxu0 0.0
      %309 = vmatpush1.msra.mxu0 0.0
      %310 = vmatprep.subr.mxu0 0.0
      %311 = vmatpush1.msra.mxu0 0.0
      %312 = vmatprep.subr.mxu0 0.0
      %313 = vmatpush1.msra.mxu0 0.0
      %314 = vmatprep.subr.mxu0 0.0
      %315 = vmatpush1.msra.mxu0 0.0
      %316 = vmatprep.subr.mxu0 0.0
      %317 = vmatpush1.msra.mxu0 0.0
      %318 = vmatprep.subr.mxu0 0.0
      %319 = vmatpush1.msra.mxu0 0.0
      %320 = vmatprep.subr.mxu0 0.0
      %321 = vmatpush1.msra.mxu0 0.0
      %322 = vmatprep.subr.mxu0 0.0
      %323 = vmatpush1.msra.mxu0 0.0
      %324 = vmatprep.subr.mxu0 0.0
      %325 = vmatpush1.msra.mxu0 0.0
      %326 = vmatprep.subr.mxu0 0.0
      %327 = vmatpush1.msra.mxu0 0.0
      %328 = vmatprep.subr.mxu0 0.0
      %329 = vmatpush1.msra.mxu0 0.0
      %330 = vmatprep.subr.mxu0 0.0
      %331 = vmatpush1.msra.mxu0 0.0
      %332 = vmatprep.subr.mxu0 0.0
      %333 = vmatpush1.msra.mxu0 0.0
      %334 = vmatprep.mubr.f32.mxu0 0.0
      %335 = vmatmul.mubr.f32.gmra.mrb[0].mxu0 %v219
      %v336 = vpop.f32.mrb[0].mxu0
      %v337 = vadd.f32 0.0, %v336
      %v338 = vpop.f32.mrb[0].mxu0
      %339 = vmatprep.mubr.f32.mxu0 0.0
      %340 = vmatmul.mubr.f32.gmra.mrb[0].mxu0 %v222
      %v341 = vpop.f32.mrb[0].mxu0
      %v342 = vadd.f32 0.0, %v341
      %v343 = vpop.f32.mrb[0].mxu0
      %344 = vmatprep.mubr.f32.mxu0 0.0
      %345 = vmatmul.mubr.f32.gmra.mrb[0].mxu0 %v225
      %v346 = vpop.f32.mrb[0].mxu0
      %v347 = vadd.f32 0.0, %v346
      %v348 = vpop.f32.mrb[0].mxu0
      %349 = vmatprep.mubr.f32.mxu0 0.0
      %350 = vmatmul.mubr.f32.gmra.mrb[0].mxu0 %v228
      %v351 = vpop.f32.mrb[0].mxu0
      %v352 = vadd.f32 0.0, %v351
      %v353 = vpop.f32.mrb[0].mxu0
      %354 = vmatprep.mubr.f32.mxu0 0.0
      %355 = vmatmul.mubr.f32.gmra.mrb[0].mxu0 %v231
      %v356 = vpop.f32.mrb[0].mxu0
      %v357 = vadd.f32 0.0, %v356
      %v358 = vpop.f32.mrb[0].mxu0
      %359 = vmatprep.mubr.f32.mxu0 0.0
      %360 = vmatmul.mubr.f32.gmra.mrb[0].mxu0 %v234
      %v361 = vpop.f32.mrb[0].mxu0
      %v362 = vadd.f32 0.0, %v361
      %v363 = vpop.f32.mrb[0].mxu0
      %364 = vmatprep.mubr.f32.mxu0 0.0
      %365 = vmatmul.mubr.f32.gmra.mrb[0].mxu0 %v237
      %v366 = vpop.f32.mrb[0].mxu0
      %v367 = vadd.f32 0.0, %v366
      %v368 = vpop.f32.mrb[0].mxu0
      %369 = vmatprep.mubr.f32.mxu0 0.0
      %370 = vmatmul.mubr.f32.gmra.mrb[0].mxu0 %v240
      %v371 = vpop.f32.mrb[0].mxu0
      %v372 = vadd.f32 0.0, %v371
      %v373 = vpop.f32.mrb[0].mxu0
      %374 = vmatprep.mubr.f32.mxu0 0.0
      %375 = vmatmul.mubr.f32.gmra.mrb[0].mxu0 %v243
      %v376 = vpop.f32.mrb[0].mxu0
      %v377 = vadd.f32 0.0, %v376
      %v378 = vpop.f32.mrb[0].mxu0
      %379 = vmatprep.mubr.f32.mxu0 0.0
      %380 = vmatmul.mubr.f32.gmra.mrb[0].mxu0 %v246
      %v381 = vpop.f32.mrb[0].mxu0
      %v382 = vadd.f32 0.0, %v381
      %v383 = vpop.f32.mrb[0].mxu0
      %384 = vmatprep.mubr.f32.mxu0 0.0
      %385 = vmatmul.mubr.f32.gmra.mrb[0].mxu0 %v249
      %v386 = vpop.f32.mrb[0].mxu0
      %v387 = vadd.f32 0.0, %v386
      %v388 = vpop.f32.mrb[0].mxu0
      %389 = vmatprep.mubr.f32.mxu0 0.0
      %390 = vmatmul.mubr.f32.gmra.mrb[0].mxu0 %v252
      %v391 = vpop.f32.mrb[0].mxu0
      %v392 = vadd.f32 0.0, %v391
      %v393 = vpop.f32.mrb[0].mxu0
      %394 = vmatprep.mubr.f32.mxu0 0.0
      %395 = vmatmul.mubr.f32.gmra.mrb[0].mxu0 %v255
      %v396 = vpop.f32.mrb[0].mxu0
      %v397 = vadd.f32 0.0, %v396
      %v398 = vpop.f32.mrb[0].mxu0
      %399 = vmatprep.mubr.f32.mxu0 0.0
      %400 = vmatmul.mubr.f32.gmra.mrb[0].mxu0 %v258
      %v401 = vpop.f32.mrb[0].mxu0
      %v402 = vadd.f32 0.0, %v401
      %v403 = vpop.f32.mrb[0].mxu0
      %404 = vmatprep.mubr.f32.mxu0 0.0
      %405 = vmatmul.mubr.f32.gmra.mrb[0].mxu0 %v261
      %v406 = vpop.f32.mrb[0].mxu0
      %v407 = vadd.f32 0.0, %v406
      %v408 = vpop.f32.mrb[0].mxu0
      %409 = vmatprep.mubr.f32.mxu0 0.0
      %410 = vmatmul.mubr.f32.gmra.mrb[0].mxu0 %v264
      %v411 = vpop.f32.mrb[0].mxu0
      %v412 = vadd.f32 0.0, %v411
      %v413 = vpop.f32.mrb[0].mxu0
      %414 = vdwg.mxu0
      %415 = vst [vmem:[%s194] sm:$0xff] %v337
      %416 = vst [vmem:[%s194 + $0x8] sm:$0xff] %v342
      %417 = vst [vmem:[%s194 + $0x10] sm:$0xff] %v347
      %418 = vst [vmem:[%s194 + $0x18] sm:$0xff] %v352
      %419 = vst [vmem:[%s194 + $0x20] sm:$0xff] %v357
      %420 = vst [vmem:[%s194 + $0x28] sm:$0xff] %v362
      %421 = vst [vmem:[%s194 + $0x30] sm:$0xff] %v367
      %422 = vst [vmem:[%s194 + $0x38] sm:$0xff] %v372
      %423 = vst [vmem:[%s194 + $0x40] sm:$0xff] %v377
      %424 = vst [vmem:[%s194 + $0x48] sm:$0xff] %v382
      %425 = vst [vmem:[%s194 + $0x50] sm:$0xff] %v387
      %426 = vst [vmem:[%s194 + $0x58] sm:$0xff] %v392
      %427 = vst [vmem:[%s194 + $0x60] sm:$0xff] %v397
      %428 = vst [vmem:[%s194 + $0x68] sm:$0xff] %v402
      %429 = vst [vmem:[%s194 + $0x70] sm:$0xff] %v407
      %430 = vst [vmem:[%s194 + $0x78] sm:$0xff] %v412
      %v431 = vld [vmem:[%s188] sm:$0xff]
      %v432 = vld [vmem:[%s188 + $0x8] sm:$0xff]
      %v433 = vld [vmem:[%s188 + $0x10] sm:$0xff]
      %v434 = vld [vmem:[%s188 + $0x18] sm:$0xff]
      %v435 = vld [vmem:[%s188 + $0x20] sm:$0xff]
      %v436 = vld [vmem:[%s188 + $0x28] sm:$0xff]
      %v437 = vld [vmem:[%s188 + $0x30] sm:$0xff]
      %v438 = vld [vmem:[%s188 + $0x38] sm:$0xff]
      %v439 = vld [vmem:[%s188 + $0x40] sm:$0xff]
      %v440 = vld [vmem:[%s188 + $0x48] sm:$0xff]
      %v441 = vld [vmem:[%s188 + $0x50] sm:$0xff]
      %v442 = vld [vmem:[%s188 + $0x58] sm:$0xff]
      %v443 = vld [vmem:[%s188 + $0x60] sm:$0xff]
      %v444 = vld [vmem:[%s188 + $0x68] sm:$0xff]
      %v445 = vld [vmem:[%s188 + $0x70] sm:$0xff]
      %v446 = vld [vmem:[%s188 + $0x78] sm:$0xff]
      %463 = vrot.lane.b32.xlu0 %v431, 12
      %v464 = vpop.permute.xlu0 %463
      %465 = vrot.lane.b32.xlu0 %v432, 12
      %v466 = vpop.permute.xlu0 %465
      %467 = vrot.lane.b32.xlu0 %v433, 12
      %v468 = vpop.permute.xlu0 %467
      %469 = vrot.lane.b32.xlu0 %v434, 12
      %v470 = vpop.permute.xlu0 %469
      %471 = vrot.lane.b32.xlu0 %v435, 12
      %v472 = vpop.permute.xlu0 %471
      %473 = vrot.lane.b32.xlu0 %v436, 12
      %v474 = vpop.permute.xlu0 %473
      %475 = vrot.lane.b32.xlu0 %v437, 12
      %v476 = vpop.permute.xlu0 %475
      %477 = vrot.lane.b32.xlu0 %v438, 12
      %v478 = vpop.permute.xlu0 %477
      %479 = vrot.lane.b32.xlu0 %v439, 12
      %v480 = vpop.permute.xlu0 %479
      %481 = vrot.lane.b32.xlu0 %v440, 12
      %v482 = vpop.permute.xlu0 %481
      %483 = vrot.lane.b32.xlu0 %v441, 12
      %v484 = vpop.permute.xlu0 %483
      %485 = vrot.lane.b32.xlu0 %v442, 12
      %v486 = vpop.permute.xlu0 %485
      %487 = vrot.lane.b32.xlu0 %v443, 12
      %v488 = vpop.permute.xlu0 %487
      %489 = vrot.lane.b32.xlu0 %v444, 12
      %v490 = vpop.permute.xlu0 %489
      %491 = vrot.lane.b32.xlu0 %v445, 12
      %v492 = vpop.permute.xlu0 %491
      %493 = vrot.lane.b32.xlu0 %v446, 12
      %v494 = vpop.permute.xlu0 %493
      %vm511 = vcmask 130144
      %512 = vst.msk [vmem:[%s194] sm:$0xff] %vm511, %v464
      %513 = vst.msk [vmem:[%s194 + $0x8] sm:$0xff] %vm511, %v466
      %514 = vst.msk [vmem:[%s194 + $0x10] sm:$0xff] %vm511, %v468
      %515 = vst.msk [vmem:[%s194 + $0x18] sm:$0xff] %vm511, %v470
      %516 = vst.msk [vmem:[%s194 + $0x20] sm:$0xff] %vm511, %v472
      %517 = vst.msk [vmem:[%s194 + $0x28] sm:$0xff] %vm511, %v474
      %518 = vst.msk [vmem:[%s194 + $0x30] sm:$0xff] %vm511, %v476
      %519 = vst.msk [vmem:[%s194 + $0x38] sm:$0xff] %vm511, %v478
      %520 = vst.msk [vmem:[%s194 + $0x40] sm:$0xff] %vm511, %v480
      %521 = vst.msk [vmem:[%s194 + $0x48] sm:$0xff] %vm511, %v482
      %522 = vst.msk [vmem:[%s194 + $0x50] sm:$0xff] %vm511, %v484
      %523 = vst.msk [vmem:[%s194 + $0x58] sm:$0xff] %vm511, %v486
      %524 = vst.msk [vmem:[%s194 + $0x60] sm:$0xff] %vm511, %v488
      %525 = vst.msk [vmem:[%s194 + $0x68] sm:$0xff] %vm511, %v490
      %526 = vst.msk [vmem:[%s194 + $0x70] sm:$0xff] %vm511, %v492
      %527 = vst.msk [vmem:[%s194 + $0x78] sm:$0xff] %vm511, %v494
      %s528 = smul.u32 16, %s14
      %p529 = scmp.lt.s32.totalorder %s528, 63
      %s530 = scalar_select %p529, %s528, 63
      %s531 = smul.addr %s530, 8
      %s532 = scalar_lea.vmem %s3, %s531
      // Predicated region
      $region33: #{normal_bottle.1} parent=31 // pred_check
        %p533 = pneg %p105
      $region34: #{normal_bottle.1} parent=31 // pred_check_branch
        %535 = sbr.rel (%p533) target = $region36
      $region35: #{normal_bottle.1} parent=31 // pred_region
        %s536 = smul.u32 16, %s14
      $region36: #{normal_bottle.1} parent=31 // pred_fallthru
        _
    $region32: #{normal_bottle.1} parent=5 // pred_fallthru
      _
    %p537 = scmp.le.s32.totalorder 2, %s9
    // Predicated region
    $region37: #{normal_bottle.1} parent=5 // pred_check
      %p538 = pneg %p537
    $region38: #{normal_bottle.1} parent=5 // pred_check_branch
      %540 = sbr.rel (%p538) target = $region40
    $region39: #{normal_bottle.1} parent=5 // pred_region
      %s541 = ssub.s32 %s9, 2
      // Predicated region
      $region41: #{normal_bottle.1} parent=39 // pred_check
        %p542 = pneg %p111
      $region42: #{normal_bottle.1} parent=39 // pred_check_branch
        %544 = sbr.rel (%p542) target = $region44
      $region43: #{normal_bottle.1} parent=39 // pred_region
        %s545 = smul.u32 16, %s15
        %p546 = scmp.lt.s32.totalorder %s545, 63
        %s547 = scalar_select %p546, %s545, 63
        %s548 = smul.addr %s547, 8
        %s549 = scalar_lea.vmem %s3, %s548
      $region44: #{normal_bottle.1} parent=39 // pred_fallthru
        _
    $region40: #{normal_bottle.1} parent=5 // pred_fallthru
      _
  $region6: #{normal_bottle.1} parent=0 // loop_footer
    %s13 = sadd.s32 1, %s9
  $region7: #{normal_bottle.1} parent=0 // loop_footer_branch
    %8 = sbr.rel target = $region3
  $region8: #{normal_bottle.1} parent=0 // loop_exit
    _

</llo_original>
